<compile_context>
chip_gen: v7x
topology: tpu7x:2x2x1
jax: 0.10.0
libtpu: 0.0.40
codegen_flags: <defaults>
</compile_context>

<pallas_src>
import math

import jax
import jax.numpy as jnp
from jax.experimental import pallas as pl
from jax.experimental.pallas import tpu as pltpu


def _round_up(n, m):
    return ((n + m - 1) // m) * m


def _mlp_kernel(x_ref, w1_ref, b1_ref, w2_ref, b2_ref, o_ref):
    # Feature-major tiles: x (4, TB) with batch on the lane dim; weights/biases
    # are tiny, VMEM-resident column vectors that broadcast across lanes.
    x = x_ref[...].astype(jnp.float32)                  # (4, TB) f32 math
    w1 = w1_ref[...]                                    # (7, 4)
    w2 = w2_ref[...]                                    # (3, 7)

    h = jnp.dot(w1, x, preferred_element_type=jnp.float32) + b1_ref[...]   # (7, TB)
    h = jnp.tanh(h)
    z = jnp.dot(w2, h, preferred_element_type=jnp.float32) + b2_ref[...]   # (3, TB)
    o_ref[...] = z.astype(o_ref.dtype)


def neural_network_forward_fm(xt, w1, b1, w2, b2, *, max_block_b=65536, io_dtype=None):
    """Feature-major fast path: xt (4, B) -> (3, B); no HBM relayout passes.

    w1: (7, 4); b1: (7,) or (7, 1); w2: (3, 7); b2: (3,) or (3, 1).
    io_dtype (e.g. jnp.bfloat16) streams activations/outputs at reduced width
    while keeping all in-kernel math in float32.
    """
    in_f, B = xt.shape
    hid = w1.shape[0]
    out_f = w2.shape[0]

    w1 = w1.astype(jnp.float32)
    w2 = w2.astype(jnp.float32)
    b1 = b1.reshape(hid, 1).astype(jnp.float32)
    b2 = b2.reshape(out_f, 1).astype(jnp.float32)

    io_dtype = xt.dtype if io_dtype is None else io_dtype
    if xt.dtype != io_dtype:
        xt = xt.astype(io_dtype)

    # Lane tile: multiple of 128, clamped to the (128-padded) batch for small B.
    # Batch is padded only to 128; a non-dividing final block is masked by Pallas,
    # so padding waste is at most 127 columns regardless of tb.
    max_block_b = max(128, (int(max_block_b) // 128) * 128)
    b128 = _round_up(max(B, 1), 128)
    tb = min(max_block_b, b128)
    if b128 != B:
        xt = jnp.pad(xt, ((0, 0), (0, b128 - B)))

    grid = (pl.cdiv(b128, tb),)

    # Rough per-step VMEM footprint: double-buffered x/out tiles + f32 temporaries.
    itemsize = jax.dtypes.canonicalize_dtype(io_dtype).itemsize
    est_vmem = 2 * (in_f + out_f) * tb * itemsize + 4 * (in_f + 2 * hid + out_f) * tb
    vmem_limit = None
    if est_vmem > (12 << 20):
        vmem_limit = min(est_vmem + (8 << 20), 96 << 20)

    out_t = pl.pallas_call(
        _mlp_kernel,
        out_shape=jax.ShapeDtypeStruct((out_f, b128), io_dtype),
        grid=grid,
        in_specs=[
            pl.BlockSpec((in_f, tb), lambda i: (0, i)),     # x tile: streamed, lane-dense
            pl.BlockSpec((hid, in_f), lambda i: (0, 0)),    # W1: resident
            pl.BlockSpec((hid, 1), lambda i: (0, 0)),       # b1: resident
            pl.BlockSpec((out_f, hid), lambda i: (0, 0)),   # W2: resident
            pl.BlockSpec((out_f, 1), lambda i: (0, 0)),     # b2: resident
        ],
        out_specs=pl.BlockSpec((out_f, tb), lambda i: (0, i)),
        compiler_params=pltpu.CompilerParams(
            dimension_semantics=("parallel",),
            vmem_limit_bytes=vmem_limit,
        ),
    )(xt, w1, b1, w2, b2)

    return out_t[:, :B]


def neural_network_forward(x, w1, b1, w2, b2, **kwargs):
    """PyTorch-layout entry point: x (B, 4) -> (B, 3).

    The two transposes here are pure layout plumbing for batch-major callers;
    perf-sensitive callers should keep activations feature-major end-to-end and
    call neural_network_forward_fm directly (saves a full HBM read+write pass
    on each side of this bandwidth-bound kernel).
    """
    return neural_network_forward_fm(x.T, w1, b1, w2, b2, **kwargs).T


def _xavier_uniform(key, out_f, in_f):
    # torch.nn.init.xavier_uniform_: U(-a, a), a = sqrt(6 / (fan_in + fan_out))
    a = math.sqrt(6.0 / (in_f + out_f))
    return jax.random.uniform(key, (out_f, in_f), jnp.float32, minval=-a, maxval=a)


if __name__ == "__main__":
    key = jax.random.PRNGKey(0)
    k_x, k_w1, k_w2, k_x2 = jax.random.split(key, 4)

    # Parameters mirroring the module's __init__ (xavier_uniform_ weights, zero biases).
    w1 = _xavier_uniform(k_w1, 7, 4)          # Linear(4, 7).weight  (7, 4)
    b1 = jnp.zeros((7,), jnp.float32)         # Linear(4, 7).bias
    w2 = _xavier_uniform(k_w2, 3, 7)          # Linear(7, 3).weight  (3, 7)
    b2 = jnp.zeros((3,), jnp.float32)         # Linear(7, 3).bias

    # --- small batch, PyTorch-layout entry point ---
    B = 8
    x = jax.random.normal(k_x, (B, 4), jnp.float32)
    ref = jnp.tanh(x @ w1.T + b1) @ w2.T + b2

    out = jax.block_until_ready(neural_network_forward(x, w1, b1, w2, b2))
    assert out.shape == (B, 3)
    assert jnp.allclose(out, ref, atol=1e-5, rtol=1e-5)

    # --- feature-major fast path (no wrapper transposes) ---
    out_fm = jax.block_until_ready(neural_network_forward_fm(x.T, w1, b1, w2, b2))
    assert out_fm.shape == (3, B)
    assert jnp.allclose(out_fm.T, ref, atol=1e-5, rtol=1e-5)

    # --- multi-step grid with a partial final block (no padding to tb) ---
    B2 = 300
    x2 = jax.random.normal(k_x2, (B2, 4), jnp.float32)
    ref2 = jnp.tanh(x2 @ w1.T + b1) @ w2.T + b2
    out2 = jax.block_until_ready(
        neural_network_forward_fm(x2.T, w1, b1, w2, b2, max_block_b=256)
    )
    assert out2.shape == (3, B2)
    assert jnp.allclose(out2.T, ref2, atol=1e-5, rtol=1e-5)

    # --- optional bf16 streaming (halves HBM bytes; math stays f32 in-kernel) ---
    out_bf = jax.block_until_ready(
        neural_network_forward_fm(x.T, w1, b1, w2, b2, io_dtype=jnp.bfloat16)
    )
    assert out_bf.dtype == jnp.bfloat16
    assert jnp.allclose(out_bf.astype(jnp.float32).T, ref, atol=5e-2, rtol=5e-2)

    print("KERNEL_OK")
</pallas_src>

<mosaic_0001>
module attributes {stable_mosaic.version = 11 : i64} {
  func.func @_mlp_kernel(%arg0: i32, %arg1: memref<4x128xf32, #tpu.memory_space<vmem>>, %arg2: memref<7x4xf32, #tpu.memory_space<vmem>>, %arg3: memref<7x1xf32, #tpu.memory_space<vmem>>, %arg4: memref<3x7xf32, #tpu.memory_space<vmem>>, %arg5: memref<3x1xf32, #tpu.memory_space<vmem>>, %arg6: memref<3x128xf32, #tpu.memory_space<vmem>>) attributes {dimension_semantics = [#tpu.dimension_semantics<parallel>], iteration_bounds = array<i64: 1>, scalar_prefetch = 0 : i64, scratch_operands = 0 : i64, tpu.core_type = #tpu.core_type<tc>, window_params = [{transform_indices = @transform_0, window_bounds = array<i64: 4, 128>}, {pipeline_mode = #tpu.pipeline_mode<synchronous>, transform_indices = @transform_1, window_bounds = array<i64: 7, 4>}, {pipeline_mode = #tpu.pipeline_mode<synchronous>, transform_indices = @transform_2, window_bounds = array<i64: 7, 1>}, {pipeline_mode = #tpu.pipeline_mode<synchronous>, transform_indices = @transform_3, window_bounds = array<i64: 3, 7>}, {pipeline_mode = #tpu.pipeline_mode<synchronous>, transform_indices = @transform_4, window_bounds = array<i64: 3, 1>}, {transform_indices = @transform_5, window_bounds = array<i64: 3, 128>}]} {
    %c0 = arith.constant 0 : index
    %c0_0 = arith.constant 0 : index
    %0 = vector.load %arg1[%c0, %c0_0] : memref<4x128xf32, #tpu.memory_space<vmem>>, vector<4x128xf32>
    %c0_1 = arith.constant 0 : index
    %c0_2 = arith.constant 0 : index
    %1 = vector.load %arg2[%c0_1, %c0_2] : memref<7x4xf32, #tpu.memory_space<vmem>>, vector<7x4xf32>
    %c0_3 = arith.constant 0 : index
    %c0_4 = arith.constant 0 : index
    %2 = vector.load %arg4[%c0_3, %c0_4] : memref<3x7xf32, #tpu.memory_space<vmem>>, vector<3x7xf32>
    %cst = arith.constant dense<0.000000e+00> : vector<7x128xf32>
    %3 = tpu.matmul %1, %0, %cst {dimension_numbers = #tpu.dot_dimension_numbers<[1], [0], [0], [1], [0, 0, 1, 1], [], []>} : vector<7x4xf32>, vector<4x128xf32>, vector<7x128xf32> -> vector<7x128xf32>
    %c0_5 = arith.constant 0 : index
    %c0_6 = arith.constant 0 : index
    %4 = vector.load %arg3[%c0_5, %c0_6] : memref<7x1xf32, #tpu.memory_space<vmem>>, vector<7x1xf32>
    %5 = vector.broadcast %4 : vector<7x1xf32> to vector<7x128xf32>
    %6 = arith.addf %3, %5 : vector<7x128xf32>
    %7 = math.tanh %6 : vector<7x128xf32>
    %cst_7 = arith.constant dense<0.000000e+00> : vector<3x128xf32>
    %8 = tpu.matmul %2, %7, %cst_7 {dimension_numbers = #tpu.dot_dimension_numbers<[1], [0], [0], [1], [0, 0, 1, 1], [], []>} : vector<3x7xf32>, vector<7x128xf32>, vector<3x128xf32> -> vector<3x128xf32>
    %c0_8 = arith.constant 0 : index
    %c0_9 = arith.constant 0 : index
    %9 = vector.load %arg5[%c0_8, %c0_9] : memref<3x1xf32, #tpu.memory_space<vmem>>, vector<3x1xf32>
    %10 = vector.broadcast %9 : vector<3x1xf32> to vector<3x128xf32>
    %11 = arith.addf %8, %10 : vector<3x128xf32>
    %c0_10 = arith.constant 0 : index
    %c0_11 = arith.constant 0 : index
    %12 = vector.load %arg6[%c0_10, %c0_11] : memref<3x128xf32, #tpu.memory_space<vmem>>, vector<3x128xf32>
    tpu.vector_store %arg6[%c0_10, %c0_11], %11 {strides = array<i32>} : memref<3x128xf32, #tpu.memory_space<vmem>>, vector<3x128xf32>,
    return
  }
  func.func @transform_0(%arg0: i32) -> (i32, i32) {
    %c0_i32 = arith.constant 0 : i32
    %c0_i32_0 = arith.constant 0 : i32
    return %c0_i32, %arg0 : i32, i32
  }
  func.func @transform_1(%arg0: i32) -> (i32, i32) {
    %c0_i32 = arith.constant 0 : i32
    %c0_i32_0 = arith.constant 0 : i32
    %c0_i32_1 = arith.constant 0 : i32
    return %c0_i32, %c0_i32_0 : i32, i32
  }
  func.func @transform_2(%arg0: i32) -> (i32, i32) {
    %c0_i32 = arith.constant 0 : i32
    %c0_i32_0 = arith.constant 0 : i32
    %c0_i32_1 = arith.constant 0 : i32
    return %c0_i32, %c0_i32_0 : i32, i32
  }
  func.func @transform_3(%arg0: i32) -> (i32, i32) {
    %c0_i32 = arith.constant 0 : i32
    %c0_i32_0 = arith.constant 0 : i32
    %c0_i32_1 = arith.constant 0 : i32
    return %c0_i32, %c0_i32_0 : i32, i32
  }
  func.func @transform_4(%arg0: i32) -> (i32, i32) {
    %c0_i32 = arith.constant 0 : i32
    %c0_i32_0 = arith.constant 0 : i32
    %c0_i32_1 = arith.constant 0 : i32
    return %c0_i32, %c0_i32_0 : i32, i32
  }
  func.func @transform_5(%arg0: i32) -> (i32, i32) {
    %c0_i32 = arith.constant 0 : i32
    %c0_i32_0 = arith.constant 0 : i32
    return %c0_i32, %arg0 : i32, i32
  }
}

</mosaic_0001>

<llo_original>
// kernel: tpu_custom_call.1
$region0: #{tpu_custom_call.1}
  #allocation0 [shape = 'u32[]', space=smem, size = 0x4, offset = 0x4, fixed_abs, tag = 'smem constant byte address 0x4 - core index']
  #allocation1 [shape = 'u32[144,128]{1,0:T(1,128)}', space=vmem, size = 0x12000, scoped, tag = 'internal scratch']
  %s0 = inlined_call_operand.vmem [shape: f32[4,128], index: 0, kind: input, shape index: {}]
  %s1 = inlined_call_operand.vmem [shape: f32[7,4], index: 1, kind: input, shape index: {}]
  %s2 = inlined_call_operand.vmem [shape: f32[7,1], index: 2, kind: input, shape index: {}]
  %s3 = inlined_call_operand.vmem [shape: f32[3,7], index: 3, kind: input, shape index: {}]
  %s4 = inlined_call_operand.vmem [shape: f32[3,1], index: 4, kind: input, shape index: {}]
  %s5 = inlined_call_operand.hbm [shape: f32[3,128], index: 5, kind: output, shape index: {}]
  %s6 = sld [smem:[#allocation0]]
  $region30: #{tpu_custom_call.1} parent=0
    _
  %s8 = ssub.s32 1, %s6
  %s9 = scalar_select 0, %s8, %s6
  $region1: #{tpu_custom_call.1} parent=0
    #allocation2 [shape = 'u8[2048]{0}', space=vmem, size = 0x800, scoped, tag = 'output window, operand 0, single buffered']
    #allocation3 [shape = 's32[1]{0}', space=sflag, size = 0x4, scoped, tag = 'scoped memory for tpu_custom_call.1']
    %10 = vsyncpa [#allocation3], 0
    // Predicated region
    $region2: #{tpu_custom_call.1} parent=1 // pred_check
      _
    $region3: #{tpu_custom_call.1} parent=1 // pred_check_branch
      %12 = sbr.rel (0) target = $region5
    $region4: #{tpu_custom_call.1} parent=1 // pred_region
      _
    $region5: #{tpu_custom_call.1} parent=1 // pred_fallthru
      _
    // Predicated region
    $region6: #{tpu_custom_call.1} parent=1 // pred_check
      _
    $region7: #{tpu_custom_call.1} parent=1 // pred_check_branch
      %14 = sbr.rel (0) target = $region9
    $region8: #{tpu_custom_call.1} parent=1 // pred_region
      _
    $region9: #{tpu_custom_call.1} parent=1 // pred_fallthru
      _
    // Predicated region
    $region10: #{tpu_custom_call.1} parent=1 // pred_check
      _
    $region11: #{tpu_custom_call.1} parent=1 // pred_check_branch
      %16 = sbr.rel (0) target = $region13
    $region12: #{tpu_custom_call.1} parent=1 // pred_region
      _
    $region13: #{tpu_custom_call.1} parent=1 // pred_fallthru
      _
    // Predicated region
    $region14: #{tpu_custom_call.1} parent=1 // pred_check
      _
    $region15: #{tpu_custom_call.1} parent=1 // pred_check_branch
      %18 = sbr.rel (0) target = $region17
    $region16: #{tpu_custom_call.1} parent=1 // pred_region
      _
    $region17: #{tpu_custom_call.1} parent=1 // pred_fallthru
      _
    // Predicated region
    $region18: #{tpu_custom_call.1} parent=1 // pred_check
      _
    $region19: #{tpu_custom_call.1} parent=1 // pred_check_branch
      %20 = sbr.rel (0) target = $region21
    $region20: #{tpu_custom_call.1} parent=1 // pred_region
      _
    $region21: #{tpu_custom_call.1} parent=1 // pred_fallthru
      _
    %v21 = vld [vmem:[%s0] sm:$0xf]
    %v22 = vld [vmem:[%s1] sm:$0x7f]
    %v23 = vld [vmem:[%s3] sm:$0x7]
    %v24 = vld [vmem:[%s2] sm:$0x7f]
    %26 = vset.pattern.permute.xlu0 0
    %27 = vperm.xlu0 %26, %v24
    %v28 = vpop.permute.xlu0 %27
    %vm30 = vcmask 31744
    %v32 = vsel %vm30, %v22, 0
    %vm34 = vcmask 1043456
    %v36 = vsel %vm34, %v21, 0
    %38 = vmatprep.subr.mxu0 0.0
    %39 = vmatpush1.msra.mxu0 %v36
    %40 = vmatprep.subr.mxu0 0.0
    %41 = vmatpush1.msra.mxu0 0.0
    %42 = vmatprep.subr.mxu0 0.0
    %43 = vmatpush1.msra.mxu0 0.0
    %44 = vmatprep.subr.mxu0 0.0
    %45 = vmatpush1.msra.mxu0 0.0
    %46 = vmatprep.subr.mxu0 0.0
    %47 = vmatpush1.msra.mxu0 0.0
    %48 = vmatprep.subr.mxu0 0.0
    %49 = vmatpush1.msra.mxu0 0.0
    %50 = vmatprep.subr.mxu0 0.0
    %51 = vmatpush1.msra.mxu0 0.0
    %52 = vmatprep.subr.mxu0 0.0
    %53 = vmatpush1.msra.mxu0 0.0
    %54 = vmatprep.subr.mxu0 0.0
    %55 = vmatpush1.msra.mxu0 0.0
    %56 = vmatprep.subr.mxu0 0.0
    %57 = vmatpush1.msra.mxu0 0.0
    %58 = vmatprep.subr.mxu0 0.0
    %59 = vmatpush1.msra.mxu0 0.0
    %60 = vmatprep.subr.mxu0 0.0
    %61 = vmatpush1.msra.mxu0 0.0
    %62 = vmatprep.subr.mxu0 0.0
    %63 = vmatpush1.msra.mxu0 0.0
    %64 = vmatprep.subr.mxu0 0.0
    %65 = vmatpush1.msra.mxu0 0.0
    %66 = vmatprep.subr.mxu0 0.0
    %67 = vmatpush1.msra.mxu0 0.0
    %68 = vmatprep.subr.mxu0 0.0
    %69 = vmatpush1.msra.mxu0 0.0
    %70 = vmatprep.subr.mxu0 0.0
    %71 = vmatpush1.msra.mxu0 0.0
    %72 = vmatprep.subr.mxu0 0.0
    %73 = vmatpush1.msra.mxu0 0.0
    %74 = vmatprep.subr.mxu0 0.0
    %75 = vmatpush1.msra.mxu0 0.0
    %76 = vmatprep.subr.mxu0 0.0
    %77 = vmatpush1.msra.mxu0 0.0
    %78 = vmatprep.subr.mxu0 0.0
    %79 = vmatpush1.msra.mxu0 0.0
    %80 = vmatprep.subr.mxu0 0.0
    %81 = vmatpush1.msra.mxu0 0.0
    %82 = vmatprep.subr.mxu0 0.0
    %83 = vmatpush1.msra.mxu0 0.0
    %84 = vmatprep.subr.mxu0 0.0
    %85 = vmatpush1.msra.mxu0 0.0
    %86 = vmatprep.subr.mxu0 0.0
    %87 = vmatpush1.msra.mxu0 0.0
    %88 = vmatprep.subr.mxu0 0.0
    %89 = vmatpush1.msra.mxu0 0.0
    %90 = vmatprep.subr.mxu0 0.0
    %91 = vmatpush1.msra.mxu0 0.0
    %92 = vmatprep.subr.mxu0 0.0
    %93 = vmatpush1.msra.mxu0 0.0
    %94 = vmatprep.subr.mxu0 0.0
    %95 = vmatpush1.msra.mxu0 0.0
    %96 = vmatprep.subr.mxu0 0.0
    %97 = vmatpush1.msra.mxu0 0.0
    %98 = vmatprep.subr.mxu0 0.0
    %99 = vmatpush1.msra.mxu0 0.0
    %100 = vmatprep.subr.mxu0 0.0
    %101 = vmatpush1.msra.mxu0 0.0
    %102 = vmatprep.mubr.f32.mxu0 0.0
    %103 = vmatmul.mubr.f32.gmra.mrb[0].mxu0 %v32
    %v104 = vpop.f32.mrb[0].mxu0
    %v105 = vadd.f32 %v28, %v104
    %v106 = vpop.f32.mrb[0].mxu0
    %107 = vdwg.mxu0
    %v108 = vtanh.pop %v105
    %v109 = vld [vmem:[%s4] sm:$0x7]
    %111 = vset.pattern.permute.xlu0 0
    %112 = vperm.xlu0 %111, %v109
    %v113 = vpop.permute.xlu0 %112
    %vm115 = vcmask 56320
    %v117 = vsel %vm115, %v23, 0
    %vm119 = vcmask 1046528
    %v121 = vsel %vm119, %v108, 0
    %123 = vmatprep.subr.mxu0 0.0
    %124 = vmatpush1.msra.mxu0 %v121
    %125 = vmatprep.subr.mxu0 0.0
    %126 = vmatpush1.msra.mxu0 0.0
    %127 = vmatprep.subr.mxu0 0.0
    %128 = vmatpush1.msra.mxu0 0.0
    %129 = vmatprep.subr.mxu0 0.0
    %130 = vmatpush1.msra.mxu0 0.0
    %131 = vmatprep.subr.mxu0 0.0
    %132 = vmatpush1.msra.mxu0 0.0
    %133 = vmatprep.subr.mxu0 0.0
    %134 = vmatpush1.msra.mxu0 0.0
    %135 = vmatprep.subr.mxu0 0.0
    %136 = vmatpush1.msra.mxu0 0.0
    %137 = vmatprep.subr.mxu0 0.0
    %138 = vmatpush1.msra.mxu0 0.0
    %139 = vmatprep.subr.mxu0 0.0
    %140 = vmatpush1.msra.mxu0 0.0
    %141 = vmatprep.subr.mxu0 0.0
    %142 = vmatpush1.msra.mxu0 0.0
    %143 = vmatprep.subr.mxu0 0.0
    %144 = vmatpush1.msra.mxu0 0.0
    %145 = vmatprep.subr.mxu0 0.0
    %146 = vmatpush1.msra.mxu0 0.0
    %147 = vmatprep.subr.mxu0 0.0
    %148 = vmatpush1.msra.mxu0 0.0
    %149 = vmatprep.subr.mxu0 0.0
    %150 = vmatpush1.msra.mxu0 0.0
    %151 = vmatprep.subr.mxu0 0.0
    %152 = vmatpush1.msra.mxu0 0.0
    %153 = vmatprep.subr.mxu0 0.0
    %154 = vmatpush1.msra.mxu0 0.0
    %155 = vmatprep.subr.mxu0 0.0
    %156 = vmatpush1.msra.mxu0 0.0
    %157 = vmatprep.subr.mxu0 0.0
    %158 = vmatpush1.msra.mxu0 0.0
    %159 = vmatprep.subr.mxu0 0.0
    %160 = vmatpush1.msra.mxu0 0.0
    %161 = vmatprep.subr.mxu0 0.0
    %162 = vmatpush1.msra.mxu0 0.0
    %163 = vmatprep.subr.mxu0 0.0
    %164 = vmatpush1.msra.mxu0 0.0
    %165 = vmatprep.subr.mxu0 0.0
    %166 = vmatpush1.msra.mxu0 0.0
    %167 = vmatprep.subr.mxu0 0.0
    %168 = vmatpush1.msra.mxu0 0.0
    %169 = vmatprep.subr.mxu0 0.0
    %170 = vmatpush1.msra.mxu0 0.0
    %171 = vmatprep.subr.mxu0 0.0
    %172 = vmatpush1.msra.mxu0 0.0
    %173 = vmatprep.subr.mxu0 0.0
    %174 = vmatpush1.msra.mxu0 0.0
    %175 = vmatprep.subr.mxu0 0.0
    %176 = vmatpush1.msra.mxu0 0.0
    %177 = vmatprep.subr.mxu0 0.0
    %178 = vmatpush1.msra.mxu0 0.0
    %179 = vmatprep.subr.mxu0 0.0
    %180 = vmatpush1.msra.mxu0 0.0
    %181 = vmatprep.subr.mxu0 0.0
    %182 = vmatpush1.msra.mxu0 0.0
    %183 = vmatprep.subr.mxu0 0.0
    %184 = vmatpush1.msra.mxu0 0.0
    %185 = vmatprep.subr.mxu0 0.0
    %186 = vmatpush1.msra.mxu0 0.0
    %187 = vmatprep.mubr.f32.mxu0 0.0
    %188 = vmatmul.mubr.f32.gmra.mrb[0].mxu0 %v117
    %v189 = vpop.f32.mrb[0].mxu0
    %v190 = vadd.f32 %v113, %v189
    %v191 = vpop.f32.mrb[0].mxu0
    %192 = vdwg.mxu0
    %193 = vst [vmem:[#allocation2] sm:$0x7] %v190
    // Predicated region
    $region22: #{tpu_custom_call.1} parent=1 // pred_check
      _
    $region23: #{tpu_custom_call.1} parent=1 // pred_check_branch
      %195 = sbr.rel (0) target = $region25
    $region24: #{tpu_custom_call.1} parent=1 // pred_region
      %s197 = ssub.s32 64, 64
      %198 = vsyncadd [#allocation3], %s197
      %s200 = sshll.u32 [#allocation2], 4
      %s201 = int_to_ptr.vmem [resolvable:$true] %s200
      %203 = dma.vmem_to_hbm [thread:$0]  %s201, 64, %s5, [#allocation3]
    $region25: #{tpu_custom_call.1} parent=1 // pred_fallthru
      _
    // Predicated region
    $region26: #{tpu_custom_call.1} parent=1 // pred_check
      _
    $region27: #{tpu_custom_call.1} parent=1 // pred_check_branch
      %205 = sbr.rel (0) target = $region29
    $region28: #{tpu_custom_call.1} parent=1 // pred_region
      %206 = dma.done [#allocation3], 64
    $region29: #{tpu_custom_call.1} parent=1 // pred_fallthru
      _
    %207 = vsyncpa [#allocation3], 1

</llo_original>
